<compile_context>
chip_gen: v7x
topology: tpu7x:2x2x1
jax: 0.10.0
libtpu: 0.0.40
codegen_flags: <defaults>
</compile_context>

<pallas_src>
import math

import jax
import jax.numpy as jnp
from jax.experimental import pallas as pl
from jax.experimental.pallas import tpu as pltpu

_GELU_C = math.sqrt(2.0 / math.pi)


def _gelu_tanh(h):
    # NewGELUActivation, computed in f32 (tanh hits the EUP slot).  If profiling
    # shows the VALU slot binding on v6e/v7x this polynomial can be moved to
    # bf16 after the bias add; keep f32 on v5e (no bf16 VPU/EUP path there).
    h2 = h * h  # hoisted square: one fewer VPU multiply per element
    return 0.5 * h * (1.0 + jnp.tanh(_GELU_C * (h + 0.044715 * h * h2)))


def mlp_resident_kernel(x_ref, w1_ref, b1_ref, w2_ref, b2_ref, o_ref):
    """Whole W1/W2 resident in VMEM; one token tile per grid step."""
    x = x_ref[...].astype(w1_ref.dtype)                    # bf16 MXU operands
    h = jnp.dot(x, w1_ref[...], preferred_element_type=jnp.float32)
    h = h + b1_ref[...].astype(jnp.float32)                # (TM, I) f32
    g = _gelu_tanh(h)
    y = jnp.dot(g.astype(w2_ref.dtype), w2_ref[...],
                preferred_element_type=jnp.float32)
    y = y + b2_ref[...].astype(jnp.float32)                # (TM, H) f32
    # dropout: eval-mode identity
    o_ref[...] = y.astype(o_ref.dtype)


def mlp_streamed_kernel(x_ref, w1_ref, b1_ref, w2_ref, b2_ref, o_ref, acc_ref):
    """Streams the intermediate dim: grid = (token tiles, I tiles)."""
    it = pl.program_id(1)

    @pl.when(it == 0)
    def _init():
        acc_ref[...] = jnp.zeros_like(acc_ref)

    x = x_ref[...].astype(w1_ref.dtype)                    # bf16 MXU operands
    h = jnp.dot(x, w1_ref[...], preferred_element_type=jnp.float32)  # (TM, TI)
    h = h + b1_ref[...].astype(jnp.float32)
    g = _gelu_tanh(h)
    acc_ref[...] += jnp.dot(g.astype(w2_ref.dtype), w2_ref[...],
                            preferred_element_type=jnp.float32)

    @pl.when(it == pl.num_programs(1) - 1)
    def _finalize():
        y = acc_ref[...] + b2_ref[...].astype(jnp.float32)
        # dropout: eval-mode identity
        o_ref[...] = y.astype(o_ref.dtype)


def _round_up(n, m):
    return ((n + m - 1) // m) * m


def _vmem_limit_bytes():
    """Generation-aware VMEM limit: ~112 MiB on 128-MiB parts (v5e/v6e),
    ~48 MiB on 64-MiB parts (v7x, budget is per TensorCore)."""
    cap = 64 * 1024 * 1024                       # conservative default (v7x per-TC)
    try:
        cap = int(getattr(pltpu.get_tpu_info(), "vmem_capacity_bytes", cap))
    except Exception:
        pass
    return max(32 * 1024 * 1024, min(cap - 16 * 1024 * 1024, 112 * 1024 * 1024))


def _pick_tm(M, act_dtype, tm_req):
    """Dtype-aware sublane alignment (8 f32 / 16 bf16 / 32 int8) plus MXU
    M-tile alignment (256 covers v5e's 128-wide and v6e/v7x's 256-wide MXU)
    once M is large enough."""
    sub = max(8, 32 // max(1, jnp.dtype(act_dtype).itemsize))
    tm = max(sub, min(int(tm_req), max(M, sub)))
    if M >= 256 and tm >= 256:
        return (tm // 256) * 256
    return _round_up(tm, sub)


def _pick_ti(I, ti_req):
    """Intermediate-dim tile: multiple of 128 (lane width) that divides I."""
    if ti_req is not None and ti_req % 128 == 0 and I % ti_req == 0:
        return int(ti_req)
    for cand in (2048, 1024, 512, 256, 128):
        if I % cand == 0:
            return cand
    return I


def mlp_forward(x, w1, b1, w2, b2, *, tm=512, ti=None,
                matmul_dtype=jnp.bfloat16, stream_intermediate=None):
    """x: (B, S, H); w1: (H, I); b1: (1, I); w2: (I, H); b2: (1, H).

    Weights are stored (in, out) -- transposed vs. torch.nn.Linear -- so the
    hot path is two row-major MXU matmuls.  Matmul operands are cast to
    `matmul_dtype` (bf16 by default: MXU-native on v5e/v6e/v7x) with f32
    accumulation; bias adds and GELU stay in f32.
    """
    B, S, H = x.shape
    I = w1.shape[1]
    M = B * S
    x2d = x.reshape(M, H)

    mm_dtype = jnp.dtype(matmul_dtype if matmul_dtype is not None else w1.dtype)
    w1c = w1.astype(mm_dtype)
    w2c = w2.astype(mm_dtype)
    b1c = b1.reshape(1, I).astype(jnp.float32)
    b2c = b2.reshape(1, H).astype(jnp.float32)

    vmem_limit = _vmem_limit_bytes()
    tm = _pick_tm(M, x.dtype, tm)
    # No wrapper-side pad/slice: partial last token block is masked by Pallas.
    # Safe here because every output row depends only on the same input row.
    grid_m = pl.cdiv(M, tm)

    # Path choice: keep weights resident when (single-buffered weights +
    # double-buffered activation tiles + f32 (tm, I) intermediate) fit the
    # per-core VMEM budget; otherwise stream the intermediate dimension.
    if stream_intermediate is None:
        resident_bytes = 2 * H * I * mm_dtype.itemsize + (I + H) * 4
        act_bytes = 4 * tm * H * x.dtype.itemsize      # 2x-buffered in/out tiles
        inter_bytes = 2 * tm * I * 4                    # f32 h / gelu slabs
        stream_intermediate = (resident_bytes + act_bytes + inter_bytes
                               > 0.7 * vmem_limit)
    use_stream = bool(stream_intermediate) and I % 128 == 0

    cost = pl.CostEstimate(
        flops=4 * M * H * I,                 # two matmuls: 2*M*H*I each
        transcendentals=M * I,               # one tanh per intermediate element
        bytes_accessed=(2 * M * H * x.dtype.itemsize
                        + 2 * H * I * mm_dtype.itemsize
                        + (I + H) * 4),
    )
    cparams = pltpu.CompilerParams(
        # "parallel" on the token axis shards tiles across the 2 TensorCores on
        # v7x (no-op on single-TC v5e/v6e); VMEM is budgeted per core.
        dimension_semantics=(("parallel", "arbitrary") if use_stream
                             else ("parallel",)),
        vmem_limit_bytes=vmem_limit,
    )

    def _const_spec(shape, single_buffer, grid_rank):
        idx = (lambda m: (0, 0)) if grid_rank == 1 else (lambda m, i: (0, 0))
        if single_buffer:
            # Constant index map => one buffer suffices; halves resident VMEM.
            return pl.BlockSpec(shape, idx, pipeline_mode=pl.Buffered(1))
        return pl.BlockSpec(shape, idx)

    def _resident_call(single_buffer):
        return pl.pallas_call(
            mlp_resident_kernel,
            out_shape=jax.ShapeDtypeStruct((M, H), x.dtype),
            grid_spec=pltpu.PrefetchScalarGridSpec(
                num_scalar_prefetch=0,
                grid=(grid_m,),
                in_specs=[
                    pl.BlockSpec((tm, H), lambda m: (m, 0)),   # streamed tokens
                    _const_spec((H, I), single_buffer, 1),     # resident W1
                    _const_spec((1, I), single_buffer, 1),     # resident b1
                    _const_spec((I, H), single_buffer, 1),     # resident W2
                    _const_spec((1, H), single_buffer, 1),     # resident b2
                ],
                out_specs=pl.BlockSpec((tm, H), lambda m: (m, 0)),
            ),
            compiler_params=cparams,
            cost_estimate=cost,
        )

    def _streamed_call(single_buffer, ti_):
        grid_i = I // ti_
        return pl.pallas_call(
            mlp_streamed_kernel,
            out_shape=jax.ShapeDtypeStruct((M, H), x.dtype),
            grid_spec=pltpu.PrefetchScalarGridSpec(
                num_scalar_prefetch=0,
                grid=(grid_m, grid_i),
                in_specs=[
                    pl.BlockSpec((tm, H), lambda m, i: (m, 0)),   # token tile
                    pl.BlockSpec((H, ti_), lambda m, i: (0, i)),  # W1 column block
                    pl.BlockSpec((1, ti_), lambda m, i: (0, i)),  # b1 block
                    pl.BlockSpec((ti_, H), lambda m, i: (i, 0)),  # W2 row block
                    _const_spec((1, H), single_buffer, 2),        # resident b2
                ],
                out_specs=pl.BlockSpec((tm, H), lambda m, i: (m, 0)),
                scratch_shapes=[pltpu.VMEM((tm, H), jnp.float32)],
            ),
            compiler_params=cparams,
            cost_estimate=cost,
        )

    if use_stream:
        ti_ = _pick_ti(I, ti)
        build = lambda single: _streamed_call(single, ti_)
    else:
        build = _resident_call

    out2d = None
    last_err = None
    # Prefer single-buffered resident operands; fall back to default double
    # buffering if this jax/libtpu combination rejects pl.Buffered(1).
    for single_buffer in (True, False):
        try:
            out2d = build(single_buffer)(x2d, w1c, b1c, w2c, b2c)
            break
        except Exception as e:  # noqa: BLE001
            last_err = e
    if out2d is None:
        raise last_err

    return out2d.reshape(B, S, H)


if __name__ == "__main__":
    key = jax.random.PRNGKey(0)
    k_cfg1, k_cfg2 = jax.random.split(key)

    def make_inputs(key, batch, seq, hidden, inter):
        kx, kw1, kb1, kw2, kb2 = jax.random.split(key, 5)
        x = jax.random.normal(kx, (batch, seq, hidden), dtype=jnp.float32)
        # PyTorch Linear stores weight (out, in); we store (in, out) for x @ W.
        lim1 = 1.0 / math.sqrt(hidden)
        w1 = jax.random.uniform(kw1, (hidden, inter), minval=-lim1, maxval=lim1,
                                dtype=jnp.float32)
        b1 = jax.random.uniform(kb1, (1, inter), minval=-lim1, maxval=lim1,
                                dtype=jnp.float32)
        lim2 = 1.0 / math.sqrt(inter)
        w2 = jax.random.uniform(kw2, (inter, hidden), minval=-lim2, maxval=lim2,
                                dtype=jnp.float32)
        b2 = jax.random.uniform(kb2, (1, hidden), minval=-lim2, maxval=lim2,
                                dtype=jnp.float32)
        return x, w1, b1, w2, b2

    def reference(x, w1, b1, w2, b2, mm_dtype=jnp.bfloat16):
        # Same numerics as the kernel: bf16 MXU operands, f32 accumulate,
        # f32 tanh-GELU and bias adds.
        h = jnp.dot(x.astype(mm_dtype), w1.astype(mm_dtype),
                    preferred_element_type=jnp.float32) + b1
        g = 0.5 * h * (1.0 + jnp.tanh(_GELU_C * (h + 0.044715 * h ** 3)))
        y = jnp.dot(g.astype(mm_dtype), w2.astype(mm_dtype),
                    preferred_element_type=jnp.float32) + b2
        return y.astype(x.dtype)

    # 1) Small ViT-ish config -> resident-weight path, token grid of 2 tiles.
    x, w1, b1, w2, b2 = make_inputs(k_cfg1, batch=2, seq=8, hidden=32, inter=64)
    out = mlp_forward(x, w1, b1, w2, b2, tm=8)
    jax.block_until_ready(out)
    assert out.shape == x.shape
    assert jnp.allclose(out, reference(x, w1, b1, w2, b2), atol=5e-3, rtol=5e-3), \
        "resident-path mismatch vs reference"

    # 2) Slightly wider config forced onto the intermediate-streaming path
    #    (the large-model / v7x 64-MiB fallback): grid (2 token tiles, 2 I tiles).
    x2, w12, b12, w22, b22 = make_inputs(k_cfg2, batch=2, seq=8, hidden=128, inter=256)
    out2 = mlp_forward(x2, w12, b12, w22, b22, tm=8, ti=128, stream_intermediate=True)
    jax.block_until_ready(out2)
    assert jnp.allclose(out2, reference(x2, w12, b12, w22, b22), atol=5e-3, rtol=5e-3), \
        "streamed-path mismatch vs reference"

    print("KERNEL_OK")
</pallas_src>

<mosaic_0001>
module attributes {stable_mosaic.version = 11 : i64} {
  func.func @mlp_resident_kernel(%arg0: i32, %arg1: memref<8x32xf32, #tpu.memory_space<vmem>>, %arg2: memref<32x64xbf16, #tpu.memory_space<vmem>>, %arg3: memref<1x64xf32, #tpu.memory_space<vmem>>, %arg4: memref<64x32xbf16, #tpu.memory_space<vmem>>, %arg5: memref<1x32xf32, #tpu.memory_space<vmem>>, %arg6: memref<8x32xf32, #tpu.memory_space<vmem>>) attributes {dimension_semantics = [#tpu.dimension_semantics<parallel>], iteration_bounds = array<i64: 2>, scalar_prefetch = 0 : i64, scratch_operands = 0 : i64, tpu.core_type = #tpu.core_type<tc>, window_params = [{transform_indices = @transform_0, window_bounds = array<i64: 8, 32>}, {pipeline_mode = #tpu.pipeline_mode<synchronous>, transform_indices = @transform_1, window_bounds = array<i64: 32, 64>}, {pipeline_mode = #tpu.pipeline_mode<synchronous>, transform_indices = @transform_2, window_bounds = array<i64: 1, 64>}, {pipeline_mode = #tpu.pipeline_mode<synchronous>, transform_indices = @transform_3, window_bounds = array<i64: 64, 32>}, {pipeline_mode = #tpu.pipeline_mode<synchronous>, transform_indices = @transform_4, window_bounds = array<i64: 1, 32>}, {transform_indices = @transform_5, window_bounds = array<i64: 8, 32>}]} {
    %c0 = arith.constant 0 : index
    %c0_0 = arith.constant 0 : index
    %0 = vector.load %arg1[%c0, %c0_0] : memref<8x32xf32, #tpu.memory_space<vmem>>, vector<8x32xf32>
    %1 = arith.truncf %0 : vector<8x32xf32> to vector<8x32xbf16>
    %c0_1 = arith.constant 0 : index
    %c0_2 = arith.constant 0 : index
    %2 = vector.load %arg2[%c0_1, %c0_2] : memref<32x64xbf16, #tpu.memory_space<vmem>>, vector<32x64xbf16>
    %cst = arith.constant dense<0.000000e+00> : vector<8x64xf32>
    %3 = tpu.matmul %1, %2, %cst {dimension_numbers = #tpu.dot_dimension_numbers<[1], [0], [0], [1], [0, 0, 1, 1], [], []>} : vector<8x32xbf16>, vector<32x64xbf16>, vector<8x64xf32> -> vector<8x64xf32>
    %c0_3 = arith.constant 0 : index
    %c0_4 = arith.constant 0 : index
    %4 = vector.load %arg3[%c0_3, %c0_4] : memref<1x64xf32, #tpu.memory_space<vmem>>, vector<1x64xf32>
    %5 = vector.broadcast %4 : vector<1x64xf32> to vector<8x64xf32>
    %6 = arith.addf %3, %5 : vector<8x64xf32>
    %7 = arith.mulf %6, %6 : vector<8x64xf32>
    %cst_5 = arith.constant 5.000000e-01 : f32
    %8 = vector.broadcast %cst_5 : f32 to vector<8x64xf32>
    %9 = arith.mulf %8, %6 : vector<8x64xf32>
    %cst_6 = arith.constant 4.471500e-02 : f32
    %10 = vector.broadcast %cst_6 : f32 to vector<8x64xf32>
    %11 = arith.mulf %10, %6 : vector<8x64xf32>
    %12 = arith.mulf %11, %7 : vector<8x64xf32>
    %13 = arith.addf %6, %12 : vector<8x64xf32>
    %cst_7 = arith.constant 0.797884583 : f32
    %14 = vector.broadcast %cst_7 : f32 to vector<8x64xf32>
    %15 = arith.mulf %14, %13 : vector<8x64xf32>
    %16 = math.tanh %15 : vector<8x64xf32>
    %cst_8 = arith.constant 1.000000e+00 : f32
    %17 = vector.broadcast %cst_8 : f32 to vector<8x64xf32>
    %18 = arith.addf %17, %16 : vector<8x64xf32>
    %19 = arith.mulf %9, %18 : vector<8x64xf32>
    %20 = arith.truncf %19 : vector<8x64xf32> to vector<8x64xbf16>
    %c0_9 = arith.constant 0 : index
    %c0_10 = arith.constant 0 : index
    %21 = vector.load %arg4[%c0_9, %c0_10] : memref<64x32xbf16, #tpu.memory_space<vmem>>, vector<64x32xbf16>
    %cst_11 = arith.constant dense<0.000000e+00> : vector<8x32xf32>
    %22 = tpu.matmul %20, %21, %cst_11 {dimension_numbers = #tpu.dot_dimension_numbers<[1], [0], [0], [1], [0, 0, 1, 1], [], []>} : vector<8x64xbf16>, vector<64x32xbf16>, vector<8x32xf32> -> vector<8x32xf32>
    %c0_12 = arith.constant 0 : index
    %c0_13 = arith.constant 0 : index
    %23 = vector.load %arg5[%c0_12, %c0_13] : memref<1x32xf32, #tpu.memory_space<vmem>>, vector<1x32xf32>
    %24 = vector.broadcast %23 : vector<1x32xf32> to vector<8x32xf32>
    %25 = arith.addf %22, %24 : vector<8x32xf32>
    %c0_14 = arith.constant 0 : index
    %c0_15 = arith.constant 0 : index
    %26 = vector.load %arg6[%c0_14, %c0_15] : memref<8x32xf32, #tpu.memory_space<vmem>>, vector<8x32xf32>
    tpu.vector_store %arg6[%c0_14, %c0_15], %25 {strides = array<i32>} : memref<8x32xf32, #tpu.memory_space<vmem>>, vector<8x32xf32>,
    return
  }
  func.func @transform_0(%arg0: i32) -> (i32, i32) {
    %c0_i32 = arith.constant 0 : i32
    %c0_i32_0 = arith.constant 0 : i32
    return %arg0, %c0_i32 : i32, i32
  }
  func.func @transform_1(%arg0: i32) -> (i32, i32) {
    %c0_i32 = arith.constant 0 : i32
    %c0_i32_0 = arith.constant 0 : i32
    %c0_i32_1 = arith.constant 0 : i32
    return %c0_i32, %c0_i32_0 : i32, i32
  }
  func.func @transform_2(%arg0: i32) -> (i32, i32) {
    %c0_i32 = arith.constant 0 : i32
    %c0_i32_0 = arith.constant 0 : i32
    %c0_i32_1 = arith.constant 0 : i32
    return %c0_i32, %c0_i32_0 : i32, i32
  }
  func.func @transform_3(%arg0: i32) -> (i32, i32) {
    %c0_i32 = arith.constant 0 : i32
    %c0_i32_0 = arith.constant 0 : i32
    %c0_i32_1 = arith.constant 0 : i32
    return %c0_i32, %c0_i32_0 : i32, i32
  }
  func.func @transform_4(%arg0: i32) -> (i32, i32) {
    %c0_i32 = arith.constant 0 : i32
    %c0_i32_0 = arith.constant 0 : i32
    %c0_i32_1 = arith.constant 0 : i32
    return %c0_i32, %c0_i32_0 : i32, i32
  }
  func.func @transform_5(%arg0: i32) -> (i32, i32) {
    %c0_i32 = arith.constant 0 : i32
    %c0_i32_0 = arith.constant 0 : i32
    return %arg0, %c0_i32 : i32, i32
  }
}

module attributes {stable_mosaic.version = 11 : i64} {
  func.func @mlp_resident_kernel(%arg0: i32, %arg1: memref<8x32xf32, #tpu.memory_space<vmem>>, %arg2: memref<32x64xbf16, #tpu.memory_space<vmem>>, %arg3: memref<1x64xf32, #tpu.memory_space<vmem>>, %arg4: memref<64x32xbf16, #tpu.memory_space<vmem>>, %arg5: memref<1x32xf32, #tpu.memory_space<vmem>>, %arg6: memref<8x32xf32, #tpu.memory_space<vmem>>) attributes {dimension_semantics = [#tpu.dimension_semantics<parallel>], iteration_bounds = array<i64: 2>, scalar_prefetch = 0 : i64, scratch_operands = 0 : i64, tpu.core_type = #tpu.core_type<tc>, window_params = [{transform_indices = @transform_0, window_bounds = array<i64: 8, 32>}, {pipeline_mode = #tpu.pipeline_mode<synchronous>, transform_indices = @transform_1, window_bounds = array<i64: 32, 64>}, {pipeline_mode = #tpu.pipeline_mode<synchronous>, transform_indices = @transform_2, window_bounds = array<i64: 1, 64>}, {pipeline_mode = #tpu.pipeline_mode<synchronous>, transform_indices = @transform_3, window_bounds = array<i64: 64, 32>}, {pipeline_mode = #tpu.pipeline_mode<synchronous>, transform_indices = @transform_4, window_bounds = array<i64: 1, 32>}, {transform_indices = @transform_5, window_bounds = array<i64: 8, 32>}]} {
    %c0 = arith.constant 0 : index
    %c0_0 = arith.constant 0 : index
    %0 = vector.load %arg1[%c0, %c0_0] : memref<8x32xf32, #tpu.memory_space<vmem>>, vector<8x32xf32>
    %1 = arith.truncf %0 : vector<8x32xf32> to vector<8x32xbf16>
    %c0_1 = arith.constant 0 : index
    %c0_2 = arith.constant 0 : index
    %2 = vector.load %arg2[%c0_1, %c0_2] : memref<32x64xbf16, #tpu.memory_space<vmem>>, vector<32x64xbf16>
    %cst = arith.constant dense<0.000000e+00> : vector<8x64xf32>
    %3 = tpu.matmul %1, %2, %cst {dimension_numbers = #tpu.dot_dimension_numbers<[1], [0], [0], [1], [0, 0, 1, 1], [], []>} : vector<8x32xbf16>, vector<32x64xbf16>, vector<8x64xf32> -> vector<8x64xf32>
    %c0_3 = arith.constant 0 : index
    %c0_4 = arith.constant 0 : index
    %4 = vector.load %arg3[%c0_3, %c0_4] : memref<1x64xf32, #tpu.memory_space<vmem>>, vector<1x64xf32>
    %5 = vector.broadcast %4 : vector<1x64xf32> to vector<8x64xf32>
    %6 = arith.addf %3, %5 : vector<8x64xf32>
    %7 = arith.mulf %6, %6 : vector<8x64xf32>
    %cst_5 = arith.constant 5.000000e-01 : f32
    %8 = vector.broadcast %cst_5 : f32 to vector<8x64xf32>
    %9 = arith.mulf %8, %6 : vector<8x64xf32>
    %cst_6 = arith.constant 4.471500e-02 : f32
    %10 = vector.broadcast %cst_6 : f32 to vector<8x64xf32>
    %11 = arith.mulf %10, %6 : vector<8x64xf32>
    %12 = arith.mulf %11, %7 : vector<8x64xf32>
    %13 = arith.addf %6, %12 : vector<8x64xf32>
    %cst_7 = arith.constant 0.797884583 : f32
    %14 = vector.broadcast %cst_7 : f32 to vector<8x64xf32>
    %15 = arith.mulf %14, %13 : vector<8x64xf32>
    %16 = math.tanh %15 : vector<8x64xf32>
    %cst_8 = arith.constant 1.000000e+00 : f32
    %17 = vector.broadcast %cst_8 : f32 to vector<8x64xf32>
    %18 = arith.addf %17, %16 : vector<8x64xf32>
    %19 = arith.mulf %9, %18 : vector<8x64xf32>
    %20 = arith.truncf %19 : vector<8x64xf32> to vector<8x64xbf16>
    %c0_9 = arith.constant 0 : index
    %c0_10 = arith.constant 0 : index
    %21 = vector.load %arg4[%c0_9, %c0_10] : memref<64x32xbf16, #tpu.memory_space<vmem>>, vector<64x32xbf16>
    %cst_11 = arith.constant dense<0.000000e+00> : vector<8x32xf32>
    %22 = tpu.matmul %20, %21, %cst_11 {dimension_numbers = #tpu.dot_dimension_numbers<[1], [0], [0], [1], [0, 0, 1, 1], [], []>} : vector<8x64xbf16>, vector<64x32xbf16>, vector<8x32xf32> -> vector<8x32xf32>
    %c0_12 = arith.constant 0 : index
    %c0_13 = arith.constant 0 : index
    %23 = vector.load %arg5[%c0_12, %c0_13] : memref<1x32xf32, #tpu.memory_space<vmem>>, vector<1x32xf32>
    %24 = vector.broadcast %23 : vector<1x32xf32> to vector<8x32xf32>
    %25 = arith.addf %22, %24 : vector<8x32xf32>
    %c0_14 = arith.constant 0 : index
    %c0_15 = arith.constant 0 : index
    %26 = vector.load %arg6[%c0_14, %c0_15] : memref<8x32xf32, #tpu.memory_space<vmem>>, vector<8x32xf32>
    tpu.vector_store %arg6[%c0_14, %c0_15], %25 {strides = array<i32>} : memref<8x32xf32, #tpu.memory_space<vmem>>, vector<8x32xf32>,
    return
  }
  func.func @transform_0(%arg0: i32) -> (i32, i32) {
    %c0_i32 = arith.constant 0 : i32
    %c0_i32_0 = arith.constant 0 : i32
    return %arg0, %c0_i32 : i32, i32
  }
  func.func @transform_1(%arg0: i32) -> (i32, i32) {
    %c0_i32 = arith.constant 0 : i32
    %c0_i32_0 = arith.constant 0 : i32
    %c0_i32_1 = arith.constant 0 : i32
    return %c0_i32, %c0_i32_0 : i32, i32
  }
  func.func @transform_2(%arg0: i32) -> (i32, i32) {
    %c0_i32 = arith.constant 0 : i32
    %c0_i32_0 = arith.constant 0 : i32
    %c0_i32_1 = arith.constant 0 : i32
    return %c0_i32, %c0_i32_0 : i32, i32
  }
  func.func @transform_3(%arg0: i32) -> (i32, i32) {
    %c0_i32 = arith.constant 0 : i32
    %c0_i32_0 = arith.constant 0 : i32
    %c0_i32_1 = arith.constant 0 : i32
    return %c0_i32, %c0_i32_0 : i32, i32
  }
  func.func @transform_4(%arg0: i32) -> (i32, i32) {
    %c0_i32 = arith.constant 0 : i32
    %c0_i32_0 = arith.constant 0 : i32
    %c0_i32_1 = arith.constant 0 : i32
    return %c0_i32, %c0_i32_0 : i32, i32
  }
  func.func @transform_5(%arg0: i32) -> (i32, i32) {
    %c0_i32 = arith.constant 0 : i32
    %c0_i32_0 = arith.constant 0 : i32
    return %arg0, %c0_i32 : i32, i32
  }
}

</mosaic_0001>

<llo_original>
// kernel: tpu_custom_call.1
$region0: #{tpu_custom_call.1}
  #allocation0 [shape = 'u32[]', space=smem, size = 0x4, offset = 0x4, fixed_abs, tag = 'smem constant byte address 0x4 - core index']
  #allocation1 [shape = 'u32[144,128]{1,0:T(1,128)}', space=vmem, size = 0x12000, scoped, tag = 'internal scratch']
  %s0 = inlined_call_operand.vmem [shape: f32[16,32], index: 0, kind: input, shape index: {}]
  %s1 = inlined_call_operand.vmem [shape: bf16[32,64], index: 1, kind: input, shape index: {}]
  %s2 = inlined_call_operand.vmem [shape: f32[1,64], index: 2, kind: input, shape index: {}]
  %s3 = inlined_call_operand.vmem [shape: bf16[64,32], index: 3, kind: input, shape index: {}]
  %s4 = inlined_call_operand.vmem [shape: f32[1,32], index: 4, kind: input, shape index: {}]
  %s5 = inlined_call_operand.hbm [shape: f32[16,32], index: 5, kind: output, shape index: {}]
  %s6 = sld [smem:[#allocation0]]
  $region53: #{tpu_custom_call.1} parent=0
    _
  %s8 = ssub.s32 1, %s6
  %s9 = scalar_select 0, %s8, %s6
  $region1: #{tpu_custom_call.1} parent=0
    #allocation2 [shape = 'u8[8192]{0}', space=vmem, size = 0x2000, scoped, tag = 'output window, operand 0']
    #allocation3 [shape = 's32[2]{0}', space=sflag, size = 0x8, scoped, tag = 'scoped memory for tpu_custom_call.1']
    %10 = vsyncpa [#allocation3], 0
    %s11 = scalar_lea.sflag [#allocation3], 1
    %12 = vsyncpa %s11, 0
    loop: start=0, step=1, limit=4
    $region2: #{tpu_custom_call.1} parent=1 // loop_pre_header
      _
    $region3: #{tpu_custom_call.1} parent=1 // loop_header
      %s14 = sphi 0, %s18
      %p15 = scmp.ge.s32.totalorder %s14, 4
      %s24 = sphi 0, %s26
      %s27 = sphi 0, %s24
      %s28 = sphi 0, %s27
      %s44 = sphi 0, %s28
      %s48 = sphi 0, %s48
      %s50 = sphi 0, %s48
      %s51 = sphi 0, %s50
      %s65 = sphi 0, %s51
      %s69 = sphi 0, %s69
      %s71 = sphi 0, %s69
      %s72 = sphi 0, %s71
      %s86 = sphi 0, %s72
      %s90 = sphi 0, %s90
      %s92 = sphi 0, %s90
      %s93 = sphi 0, %s92
      %s107 = sphi 0, %s93
      %s111 = sphi 0, %s111
      %s113 = sphi 0, %s111
      %s114 = sphi 0, %s113
      %s128 = sphi 0, %s114
      %s134 = sphi 0, %s136
      %s137 = sphi 0, %s134
      %s138 = sphi 0, %s137
      %s154 = sphi 0, %s138
    $region4: #{tpu_custom_call.1} parent=1 // loop_header_branch
      %17 = sbr.rel (%p15) target = $region8
    $region5: #{tpu_custom_call.1} parent=1 // loop_body
      %s19 = ssub.s32 %s14, 1
      %s20 = ssub.s32 %s14, 2
      %s21 = sadd.s32 %s14, 1
      %s22 = ssub.s32 %s14, %s21
      %p23 = scmp.eq.s32.totalorder %s22, 0
      %s25 = sadd.s32 %s24, 1
      %s26 = scalar_select %p23, %s24, %s25
      %p29 = pneg %p23
      %p30 = scmp.eq.s32.totalorder %s14, 1
      %p31 = por %p29, %p30
      %p32 = scmp.ne.s32.totalorder %s24, %s27
      %p33 = scmp.eq.s32.totalorder %s14, 0
      %p34 = por %p32, %p33
      %p35 = scmp.ne.s32.totalorder %s24, %s27
      %p36 = scmp.eq.s32.totalorder %s19, 1
      %p37 = por %p35, %p36
      %p38 = scmp.ne.s32.totalorder %s27, %s28
      %p39 = scmp.eq.s32.totalorder %s19, 0
      %p40 = por %p38, %p39
      %p41 = scmp.ne.s32.totalorder %s27, %s28
      %p42 = scmp.eq.s32.totalorder %s20, 1
      %p43 = por %p41, %p42
      %p45 = scmp.ne.s32.totalorder %s28, %s44
      %p46 = scmp.eq.s32.totalorder %s20, 0
      %p47 = por %p45, %p46
      %s49 = sadd.s32 %s48, 1
      %p52 = scmp.eq.s32.totalorder %s14, 1
      %p53 = scmp.ne.s32.totalorder %s48, %s50
      %p54 = scmp.eq.s32.totalorder %s14, 0
      %p55 = por %p53, %p54
      %p56 = scmp.ne.s32.totalorder %s48, %s50
      %p57 = scmp.eq.s32.totalorder %s19, 1
      %p58 = por %p56, %p57
      %p59 = scmp.ne.s32.totalorder %s50, %s51
      %p60 = scmp.eq.s32.totalorder %s19, 0
      %p61 = por %p59, %p60
      %p62 = scmp.ne.s32.totalorder %s50, %s51
      %p63 = scmp.eq.s32.totalorder %s20, 1
      %p64 = por %p62, %p63
      %p66 = scmp.ne.s32.totalorder %s51, %s65
      %p67 = scmp.eq.s32.totalorder %s20, 0
      %p68 = por %p66, %p67
      %s70 = sadd.s32 %s69, 1
      %p73 = scmp.eq.s32.totalorder %s14, 1
      %p74 = scmp.ne.s32.totalorder %s69, %s71
      %p75 = scmp.eq.s32.totalorder %s14, 0
      %p76 = por %p74, %p75
      %p77 = scmp.ne.s32.totalorder %s69, %s71
      %p78 = scmp.eq.s32.totalorder %s19, 1
      %p79 = por %p77, %p78
      %p80 = scmp.ne.s32.totalorder %s71, %s72
      %p81 = scmp.eq.s32.totalorder %s19, 0
      %p82 = por %p80, %p81
      %p83 = scmp.ne.s32.totalorder %s71, %s72
      %p84 = scmp.eq.s32.totalorder %s20, 1
      %p85 = por %p83, %p84
      %p87 = scmp.ne.s32.totalorder %s72, %s86
      %p88 = scmp.eq.s32.totalorder %s20, 0
      %p89 = por %p87, %p88
      %s91 = sadd.s32 %s90, 1
      %p94 = scmp.eq.s32.totalorder %s14, 1
      %p95 = scmp.ne.s32.totalorder %s90, %s92
      %p96 = scmp.eq.s32.totalorder %s14, 0
      %p97 = por %p95, %p96
      %p98 = scmp.ne.s32.totalorder %s90, %s92
      %p99 = scmp.eq.s32.totalorder %s19, 1
      %p100 = por %p98, %p99
      %p101 = scmp.ne.s32.totalorder %s92, %s93
      %p102 = scmp.eq.s32.totalorder %s19, 0
      %p103 = por %p101, %p102
      %p104 = scmp.ne.s32.totalorder %s92, %s93
      %p105 = scmp.eq.s32.totalorder %s20, 1
      %p106 = por %p104, %p105
      %p108 = scmp.ne.s32.totalorder %s93, %s107
      %p109 = scmp.eq.s32.totalorder %s20, 0
      %p110 = por %p108, %p109
      %s112 = sadd.s32 %s111, 1
      %p115 = scmp.eq.s32.totalorder %s14, 1
      %p116 = scmp.ne.s32.totalorder %s111, %s113
      %p117 = scmp.eq.s32.totalorder %s14, 0
      %p118 = por %p116, %p117
      %p119 = scmp.ne.s32.totalorder %s111, %s113
      %p120 = scmp.eq.s32.totalorder %s19, 1
      %p121 = por %p119, %p120
      %p122 = scmp.ne.s32.totalorder %s113, %s114
      %p123 = scmp.eq.s32.totalorder %s19, 0
      %p124 = por %p122, %p123
      %p125 = scmp.ne.s32.totalorder %s113, %s114
      %p126 = scmp.eq.s32.totalorder %s20, 1
      %p127 = por %p125, %p126
      %p129 = scmp.ne.s32.totalorder %s114, %s128
      %p130 = scmp.eq.s32.totalorder %s20, 0
      %p131 = por %p129, %p130
      %s132 = ssub.s32 %s14, %s21
      %p133 = scmp.eq.s32.totalorder %s132, 0
      %s135 = sadd.s32 %s134, 1
      %s136 = scalar_select %p133, %s134, %s135
      %p139 = pneg %p133
      %p140 = scmp.eq.s32.totalorder %s14, 1
      %p141 = por %p139, %p140
      %p142 = scmp.ne.s32.totalorder %s134, %s137
      %p143 = scmp.eq.s32.totalorder %s14, 0
      %p144 = por %p142, %p143
      %p145 = scmp.ne.s32.totalorder %s134, %s137
      %p146 = scmp.eq.s32.totalorder %s19, 1
      %p147 = por %p145, %p146
      %p148 = scmp.ne.s32.totalorder %s137, %s138
      %p149 = scmp.eq.s32.totalorder %s19, 0
      %p150 = por %p148, %p149
      %p151 = scmp.ne.s32.totalorder %s137, %s138
      %p152 = scmp.eq.s32.totalorder %s20, 1
      %p153 = por %p151, %p152
      %p155 = scmp.ne.s32.totalorder %s138, %s154
      %p156 = scmp.eq.s32.totalorder %s20, 0
      %p157 = por %p155, %p156
      %p158 = scmp.le.s32.totalorder 1, %s14
      %p159 = scmp.lt.s32.totalorder %s14, 3
      %p160 = pnand %p158, %p159
      %p161 = pneg %p160
      // Predicated region
      $region9: #{tpu_custom_call.1} parent=5 // pred_check
        _
      $region10: #{tpu_custom_call.1} parent=5 // pred_check_branch
        %163 = sbr.rel (%p160) target = $region12
      $region11: #{tpu_custom_call.1} parent=5 // pred_region
        %s164 = ssub.s32 %s14, 1
        // Predicated region
        $region13: #{tpu_custom_call.1} parent=11 // pred_check
          %p165 = pneg %p61
        $region14: #{tpu_custom_call.1} parent=11 // pred_check_branch
          %167 = sbr.rel (%p165) target = $region16
        $region15: #{tpu_custom_call.1} parent=11 // pred_region
          _
        $region16: #{tpu_custom_call.1} parent=11 // pred_fallthru
          _
        // Predicated region
        $region17: #{tpu_custom_call.1} parent=11 // pred_check
          %p168 = pneg %p82
        $region18: #{tpu_custom_call.1} parent=11 // pred_check_branch
          %170 = sbr.rel (%p168) target = $region20
        $region19: #{tpu_custom_call.1} parent=11 // pred_region
          _
        $region20: #{tpu_custom_call.1} parent=11 // pred_fallthru
          _
        // Predicated region
        $region21: #{tpu_custom_call.1} parent=11 // pred_check
          %p171 = pneg %p103
        $region22: #{tpu_custom_call.1} parent=11 // pred_check_branch
          %173 = sbr.rel (%p171) target = $region24
        $region23: #{tpu_custom_call.1} parent=11 // pred_region
          _
        $region24: #{tpu_custom_call.1} parent=11 // pred_fallthru
          _
        // Predicated region
        $region25: #{tpu_custom_call.1} parent=11 // pred_check
          %p174 = pneg %p124
        $region26: #{tpu_custom_call.1} parent=11 // pred_check_branch
          %176 = sbr.rel (%p174) target = $region28
        $region27: #{tpu_custom_call.1} parent=11 // pred_region
          _
        $region28: #{tpu_custom_call.1} parent=11 // pred_fallthru
          _
      $region12: #{tpu_custom_call.1} parent=5 // pred_fallthru
        _
      %p177 = scmp.lt.s32.totalorder %s14, 2
      // Predicated region
      $region29: #{tpu_custom_call.1} parent=5 // pred_check
        %p178 = pneg %p177
      $region30: #{tpu_custom_call.1} parent=5 // pred_check_branch
        %180 = sbr.rel (%p178) target = $region32
      $region31: #{tpu_custom_call.1} parent=5 // pred_region
        // Predicated region
        $region33: #{tpu_custom_call.1} parent=31 // pred_check
          %p181 = pneg %p34
        $region34: #{tpu_custom_call.1} parent=31 // pred_check_branch
          %183 = sbr.rel (%p181) target = $region36
        $region35: #{tpu_custom_call.1} parent=31 // pred_region
          %p184 = scmp.lt.s32.totalorder %s14, 1
          %s185 = scalar_select %p184, %s14, 1
          %s186 = smul.addr %s185, 8
          %s187 = scalar_lea.vmem %s0, %s186
        $region36: #{tpu_custom_call.1} parent=31 // pred_fallthru
          _
      $region32: #{tpu_custom_call.1} parent=5 // pred_fallthru
        _
      %p188 = scmp.le.s32.totalorder 1, %s14
      %p189 = scmp.lt.s32.totalorder %s14, 3
      %p190 = pnand %p188, %p189
      %p191 = pneg %p190
      // Predicated region
      $region37: #{tpu_custom_call.1} parent=5 // pred_check
        _
      $region38: #{tpu_custom_call.1} parent=5 // pred_check_branch
        %193 = sbr.rel (%p190) target = $region40
      $region39: #{tpu_custom_call.1} parent=5 // pred_region
        %s194 = ssub.s32 %s14, 1
        %p195 = scmp.lt.s32.totalorder %s19, 1
        %s196 = scalar_select %p195, %s19, 1
        %s197 = smul.addr %s196, 8
        %s198 = scalar_lea.vmem %s0, %s197
        %p199 = pneg %p40
        %p200 = pneg %p37
        %p201 = pneg %p61
        %p202 = pneg %p58
        %p203 = pneg %p82
        %p204 = pneg %p79
        %p205 = pneg %p103
        %p206 = pneg %p100
        %p207 = pneg %p124
        %p208 = pneg %p121
        %p209 = pneg %p150
        %p210 = pneg %p147
        %s211 = sand.u32 %s137, 1
        %s212 = scalar_lea.sflag [#allocation3], %s211
        %s213 = sand.u32 %s137, 1
        %s214 = smul.addr %s213, 8
        %s215 = scalar_lea.vmem [#allocation2], %s214
        %p216 = scmp.lt.s32.totalorder %s19, 1
        %s217 = scalar_select %p216, %s19, 1
        %s218 = smul.addr %s217, 8
        %s219 = scalar_lea.vmem %s0, %s218
        %v221 = vld [vmem:[%s219] sm:$0xff]
        %v222 = vpack.c.bf16 %v221, %v221
        %v223 = vld [vmem:[%s1] sm:$0xf]
        %v224 = vld [vmem:[%s1 + $0x4] sm:$0xf]
        %v225 = vld [vmem:[%s1 + $0x8] sm:$0xf]
        %v226 = vld [vmem:[%s1 + $0xc] sm:$0xf]
        %v227 = vld [vmem:[%s2] sm:$0x1]
        %v229 = vlaneseq
        %v230 = vshrl.u32 %v229, 7
        %v231 = vsub.s32 0, %v230
        %v232 = vrot.slane %v227, %v231
        %v238 = vunpack.c.l.b16 %v223
        %v239 = vunpack.c.l.b16 %v224
        %v240 = vunpack.c.l.b16 %v225
        %v241 = vunpack.c.l.b16 %v226
        %v242 = vpack.c.b16 %v239, %v238
        %v243 = vpack.c.b16 %v241, %v240
        %vm246 = vcmask 261120
        %v248 = vsel %vm246, %v222, 0
        %250 = vmatprep.subr.bf16.mxu0 0
        %251 = vmatpush1.bf16.msra.mxu0 %v242
        %252 = vmatprep.subr.bf16.mxu0 0
        %253 = vmatpush1.bf16.msra.mxu0 %v243
        %254 = vmatprep.subr.bf16.mxu0 0
        %255 = vmatpush1.bf16.msra.mxu0 0
        %256 = vmatprep.subr.bf16.mxu0 0
        %257 = vmatpush1.bf16.msra.mxu0 0
        %258 = vmatprep.subr.bf16.mxu0 0
        %259 = vmatpush1.bf16.msra.mxu0 0
        %260 = vmatprep.subr.bf16.mxu0 0
        %261 = vmatpush1.bf16.msra.mxu0 0
        %262 = vmatprep.subr.bf16.mxu0 0
        %263 = vmatpush1.bf16.msra.mxu0 0
        %264 = vmatprep.subr.bf16.mxu0 0
        %265 = vmatpush1.bf16.msra.mxu0 0
        %266 = vmatprep.subr.bf16.mxu0 0
        %267 = vmatpush1.bf16.msra.mxu0 0
        %268 = vmatprep.subr.bf16.mxu0 0
        %269 = vmatpush1.bf16.msra.mxu0 0
        %270 = vmatprep.subr.bf16.mxu0 0
        %271 = vmatpush1.bf16.msra.mxu0 0
        %272 = vmatprep.subr.bf16.mxu0 0
        %273 = vmatpush1.bf16.msra.mxu0 0
        %274 = vmatprep.subr.bf16.mxu0 0
        %275 = vmatpush1.bf16.msra.mxu0 0
        %276 = vmatprep.subr.bf16.mxu0 0
        %277 = vmatpush1.bf16.msra.mxu0 0
        %278 = vmatprep.subr.bf16.mxu0 0
        %279 = vmatpush1.bf16.msra.mxu0 0
        %280 = vmatprep.subr.bf16.mxu0 0
        %281 = vmatpush1.bf16.msra.mxu0 0
        %282 = vmatprep.mubr.bf16.mxu0 0
        %283 = vmatmul.mubr.bf16.gmra.mrb[0].mxu0 %v248
        %v284 = vpop.f32.mrb[0].mxu0
        %v285 = vadd.f32 %v232, %v284
        %v286 = vpop.f32.mrb[0].mxu0
        %v287 = vpop.f32.mrb[0].mxu0
        %v288 = vpop.f32.mrb[0].mxu0
        %289 = vdwg.mxu0
        %v290 = vmul.f32 %v285, %v285
        %v291 = vmul.f32 %v285, 0.5
        %v292 = vmul.f32 %v285, 0.044715
        %v293 = vmul.f32 %v292, %v290
        %v294 = vadd.f32 %v285, %v293
        %v295 = vmul.f32 %v294, 0.7978846
        %v296 = vtanh.pop %v295
        %v297 = vadd.f32 %v296, 1.0
        %v298 = vmul.f32 %v291, %v297
        %v299 = vpack.c.bf16 %v298, %v298
        %v300 = vld [vmem:[%s3] sm:$0xf]
        %v301 = vld [vmem:[%s3 + $0x4] sm:$0xf]
        %v302 = vld [vmem:[%s3 + $0x8] sm:$0xf]
        %v303 = vld [vmem:[%s3 + $0xc] sm:$0xf]
        %v304 = vld [vmem:[%s3 + $0x10] sm:$0xf]
        %v305 = vld [vmem:[%s3 + $0x14] sm:$0xf]
        %v306 = vld [vmem:[%s3 + $0x18] sm:$0xf]
        %v307 = vld [vmem:[%s3 + $0x1c] sm:$0xf]
        %v308 = vld [vmem:[%s4] sm:$0x1]
        %v310 = vlaneseq
        %v311 = vshrl.u32 %v310, 7
        %v312 = vsub.s32 0, %v311
        %v313 = vrot.slane %v308, %v312
        %v323 = vunpack.c.l.b16 %v300
        %v324 = vunpack.c.l.b16 %v301
        %v325 = vunpack.c.l.b16 %v302
        %v326 = vunpack.c.l.b16 %v303
        %v327 = vunpack.c.l.b16 %v304
        %v328 = vunpack.c.l.b16 %v305
        %v329 = vunpack.c.l.b16 %v306
        %v330 = vunpack.c.l.b16 %v307
        %v331 = vpack.c.b16 %v324, %v323
        %v332 = vpack.c.b16 %v326, %v325
        %v333 = vpack.c.b16 %v328, %v327
        %v334 = vpack.c.b16 %v330, %v329
        %vm339 = vcmask 523264
        %v341 = vsel %vm339, %v299, 0
        %343 = vmatprep.subr.bf16.mxu0 0
        %344 = vmatpush1.bf16.msra.mxu0 %v331
        %345 = vmatprep.subr.bf16.mxu0 0
        %346 = vmatpush1.bf16.msra.mxu0 %v332
        %347 = vmatprep.subr.bf16.mxu0 0
        %348 = vmatpush1.bf16.msra.mxu0 %v333
        %349 = vmatprep.subr.bf16.mxu0 0
        %350 = vmatpush1.bf16.msra.mxu0 %v334
        %351 = vmatprep.subr.bf16.mxu0 0
        %352 = vmatpush1.bf16.msra.mxu0 0
        %353 = vmatprep.subr.bf16.mxu0 0
        %354 = vmatpush1.bf16.msra.mxu0 0
        %355 = vmatprep.subr.bf16.mxu0 0
        %356 = vmatpush1.bf16.msra.mxu0 0
        %357 = vmatprep.subr.bf16.mxu0 0
        %358 = vmatpush1.bf16.msra.mxu0 0
        %359 = vmatprep.subr.bf16.mxu0 0
        %360 = vmatpush1.bf16.msra.mxu0 0
        %361 = vmatprep.subr.bf16.mxu0 0
        %362 = vmatpush1.bf16.msra.mxu0 0
        %363 = vmatprep.subr.bf16.mxu0 0
        %364 = vmatpush1.bf16.msra.mxu0 0
        %365 = vmatprep.subr.bf16.mxu0 0
        %366 = vmatpush1.bf16.msra.mxu0 0
        %367 = vmatprep.subr.bf16.mxu0 0
        %368 = vmatpush1.bf16.msra.mxu0 0
        %369 = vmatprep.subr.bf16.mxu0 0
        %370 = vmatpush1.bf16.msra.mxu0 0
        %371 = vmatprep.subr.bf16.mxu0 0
        %372 = vmatpush1.bf16.msra.mxu0 0
        %373 = vmatprep.subr.bf16.mxu0 0
        %374 = vmatpush1.bf16.msra.mxu0 0
        %375 = vmatprep.mubr.bf16.mxu0 0
        %376 = vmatmul.mubr.bf16.gmra.mrb[0].mxu0 %v341
        %v377 = vpop.f32.mrb[0].mxu0
        %v378 = vadd.f32 %v313, %v377
        %v379 = vpop.f32.mrb[0].mxu0
        %v380 = vpop.f32.mrb[0].mxu0
        %v381 = vpop.f32.mrb[0].mxu0
        %382 = vdwg.mxu0
        %383 = vst.msk [vmem:[%s215] sm:$0xff] %vm246, %v378
        %s384 = sand.u32 %s137, 1
        %s385 = scalar_lea.sflag [#allocation3], %s384
        %s386 = sand.u32 %s137, 1
        %s387 = smul.addr %s386, 8
        %s388 = scalar_lea.vmem [#allocation2], %s387
        // Predicated region
        $region41: #{tpu_custom_call.1} parent=39 // pred_check
          %p389 = pneg %p147
        $region42: #{tpu_custom_call.1} parent=39 // pred_check_branch
          %391 = sbr.rel (%p389) target = $region44
        $region43: #{tpu_custom_call.1} parent=39 // pred_region
          %s393 = ssub.s32 128, 128
          %394 = vsyncadd %s385, %s393
          %s395 = smul.addr %s19, 128
          %s396 = scalar_lea.hbm %s5, %s395
          %s398 = sshll.u32 %s388, 4
          %s399 = int_to_ptr.vmem [resolvable:$true] %s398
          %401 = dma.vmem_to_hbm [thread:$0]  %s399, 128, %s396, %s385
        $region44: #{tpu_custom_call.1} parent=39 // pred_fallthru
          _
      $region40: #{tpu_custom_call.1} parent=5 // pred_fallthru
        _
      %p402 = scmp.le.s32.totalorder 2, %s14
      // Predicated region
      $region45: #{tpu_custom_call.1} parent=5 // pred_check
        %p403 = pneg %p402
      $region46: #{tpu_custom_call.1} parent=5 // pred_check_branch
        %405 = sbr.rel (%p403) target = $region48
      $region47: #{tpu_custom_call.1} parent=5 // pred_region
        %s406 = ssub.s32 %s14, 2
        // Predicated region
        $region49: #{tpu_custom_call.1} parent=47 // pred_check
          %p407 = pneg %p153
        $region50: #{tpu_custom_call.1} parent=47 // pred_check_branch
          %409 = sbr.rel (%p407) target = $region52
        $region51: #{tpu_custom_call.1} parent=47 // pred_region
          %s410 = sand.u32 %s138, 1
          %s411 = scalar_lea.sflag [#allocation3], %s410
          %s412 = sand.u32 %s138, 1
          %s413 = smul.addr %s412, 8
          %s414 = scalar_lea.vmem [#allocation2], %s413
          %415 = dma.done %s411, 128
        $region52: #{tpu_custom_call.1} parent=47 // pred_fallthru
          _
      $region48: #{tpu_custom_call.1} parent=5 // pred_fallthru
        _
    $region6: #{tpu_custom_call.1} parent=1 // loop_footer
      %s18 = sadd.s32 1, %s14
    $region7: #{tpu_custom_call.1} parent=1 // loop_footer_branch
      %13 = sbr.rel target = $region3
    $region8: #{tpu_custom_call.1} parent=1 // loop_exit
      _
    %416 = vsyncpa [#allocation3], 1
    %s417 = scalar_lea.sflag [#allocation3], 1
    %418 = vsyncpa %s417, 1

// kernel: tpu_custom_call.1
$region0: #{tpu_custom_call.1}
  #allocation0 [shape = 'u32[]', space=smem, size = 0x4, offset = 0x4, fixed_abs, tag = 'smem constant byte address 0x4 - core index']
  #allocation1 [shape = 'u32[144,128]{1,0:T(1,128)}', space=vmem, size = 0x12000, scoped, tag = 'internal scratch']
  %s0 = inlined_call_operand.vmem [shape: f32[16,32], index: 0, kind: input, shape index: {}]
  %s1 = inlined_call_operand.vmem [shape: bf16[32,64], index: 1, kind: input, shape index: {}]
  %s2 = inlined_call_operand.vmem [shape: f32[1,64], index: 2, kind: input, shape index: {}]
  %s3 = inlined_call_operand.vmem [shape: bf16[64,32], index: 3, kind: input, shape index: {}]
  %s4 = inlined_call_operand.vmem [shape: f32[1,32], index: 4, kind: input, shape index: {}]
  %s5 = inlined_call_operand.hbm [shape: f32[16,32], index: 5, kind: output, shape index: {}]
  %s6 = sld [smem:[#allocation0]]
  $region53: #{tpu_custom_call.1} parent=0
    _
  %s8 = ssub.s32 1, %s6
  %s9 = scalar_select 0, %s8, %s6
  $region1: #{tpu_custom_call.1} parent=0
    #allocation2 [shape = 'u8[8192]{0}', space=vmem, size = 0x2000, scoped, tag = 'output window, operand 0']
    #allocation3 [shape = 's32[2]{0}', space=sflag, size = 0x8, scoped, tag = 'scoped memory for tpu_custom_call.1']
    %10 = vsyncpa [#allocation3], 0
    %s11 = scalar_lea.sflag [#allocation3], 1
    %12 = vsyncpa %s11, 0
    loop: start=0, step=1, limit=4
    $region2: #{tpu_custom_call.1} parent=1 // loop_pre_header
      _
    $region3: #{tpu_custom_call.1} parent=1 // loop_header
      %s14 = sphi 0, %s18
      %p15 = scmp.ge.s32.totalorder %s14, 4
      %s24 = sphi 0, %s26
      %s27 = sphi 0, %s24
      %s28 = sphi 0, %s27
      %s44 = sphi 0, %s28
      %s48 = sphi 0, %s48
      %s50 = sphi 0, %s48
      %s51 = sphi 0, %s50
      %s65 = sphi 0, %s51
      %s69 = sphi 0, %s69
      %s71 = sphi 0, %s69
      %s72 = sphi 0, %s71
      %s86 = sphi 0, %s72
      %s90 = sphi 0, %s90
      %s92 = sphi 0, %s90
      %s93 = sphi 0, %s92
      %s107 = sphi 0, %s93
      %s111 = sphi 0, %s111
      %s113 = sphi 0, %s111
      %s114 = sphi 0, %s113
      %s128 = sphi 0, %s114
      %s134 = sphi 0, %s136
      %s137 = sphi 0, %s134
      %s138 = sphi 0, %s137
      %s154 = sphi 0, %s138
    $region4: #{tpu_custom_call.1} parent=1 // loop_header_branch
      %17 = sbr.rel (%p15) target = $region8
    $region5: #{tpu_custom_call.1} parent=1 // loop_body
      %s19 = ssub.s32 %s14, 1
      %s20 = ssub.s32 %s14, 2
      %s21 = sadd.s32 %s14, 1
      %s22 = ssub.s32 %s14, %s21
      %p23 = scmp.eq.s32.totalorder %s22, 0
      %s25 = sadd.s32 %s24, 1
      %s26 = scalar_select %p23, %s24, %s25
      %p29 = pneg %p23
      %p30 = scmp.eq.s32.totalorder %s14, 1
      %p31 = por %p29, %p30
      %p32 = scmp.ne.s32.totalorder %s24, %s27
      %p33 = scmp.eq.s32.totalorder %s14, 0
      %p34 = por %p32, %p33
      %p35 = scmp.ne.s32.totalorder %s24, %s27
      %p36 = scmp.eq.s32.totalorder %s19, 1
      %p37 = por %p35, %p36
      %p38 = scmp.ne.s32.totalorder %s27, %s28
      %p39 = scmp.eq.s32.totalorder %s19, 0
      %p40 = por %p38, %p39
      %p41 = scmp.ne.s32.totalorder %s27, %s28
      %p42 = scmp.eq.s32.totalorder %s20, 1
      %p43 = por %p41, %p42
      %p45 = scmp.ne.s32.totalorder %s28, %s44
      %p46 = scmp.eq.s32.totalorder %s20, 0
      %p47 = por %p45, %p46
      %s49 = sadd.s32 %s48, 1
      %p52 = scmp.eq.s32.totalorder %s14, 1
      %p53 = scmp.ne.s32.totalorder %s48, %s50
      %p54 = scmp.eq.s32.totalorder %s14, 0
      %p55 = por %p53, %p54
      %p56 = scmp.ne.s32.totalorder %s48, %s50
      %p57 = scmp.eq.s32.totalorder %s19, 1
      %p58 = por %p56, %p57
      %p59 = scmp.ne.s32.totalorder %s50, %s51
      %p60 = scmp.eq.s32.totalorder %s19, 0
      %p61 = por %p59, %p60
      %p62 = scmp.ne.s32.totalorder %s50, %s51
      %p63 = scmp.eq.s32.totalorder %s20, 1
      %p64 = por %p62, %p63
      %p66 = scmp.ne.s32.totalorder %s51, %s65
      %p67 = scmp.eq.s32.totalorder %s20, 0
      %p68 = por %p66, %p67
      %s70 = sadd.s32 %s69, 1
      %p73 = scmp.eq.s32.totalorder %s14, 1
      %p74 = scmp.ne.s32.totalorder %s69, %s71
      %p75 = scmp.eq.s32.totalorder %s14, 0
      %p76 = por %p74, %p75
      %p77 = scmp.ne.s32.totalorder %s69, %s71
      %p78 = scmp.eq.s32.totalorder %s19, 1
      %p79 = por %p77, %p78
      %p80 = scmp.ne.s32.totalorder %s71, %s72
      %p81 = scmp.eq.s32.totalorder %s19, 0
      %p82 = por %p80, %p81
      %p83 = scmp.ne.s32.totalorder %s71, %s72
      %p84 = scmp.eq.s32.totalorder %s20, 1
      %p85 = por %p83, %p84
      %p87 = scmp.ne.s32.totalorder %s72, %s86
      %p88 = scmp.eq.s32.totalorder %s20, 0
      %p89 = por %p87, %p88
      %s91 = sadd.s32 %s90, 1
      %p94 = scmp.eq.s32.totalorder %s14, 1
      %p95 = scmp.ne.s32.totalorder %s90, %s92
      %p96 = scmp.eq.s32.totalorder %s14, 0
      %p97 = por %p95, %p96
      %p98 = scmp.ne.s32.totalorder %s90, %s92
      %p99 = scmp.eq.s32.totalorder %s19, 1
      %p100 = por %p98, %p99
      %p101 = scmp.ne.s32.totalorder %s92, %s93
      %p102 = scmp.eq.s32.totalorder %s19, 0
      %p103 = por %p101, %p102
      %p104 = scmp.ne.s32.totalorder %s92, %s93
      %p105 = scmp.eq.s32.totalorder %s20, 1
      %p106 = por %p104, %p105
      %p108 = scmp.ne.s32.totalorder %s93, %s107
      %p109 = scmp.eq.s32.totalorder %s20, 0
      %p110 = por %p108, %p109
      %s112 = sadd.s32 %s111, 1
      %p115 = scmp.eq.s32.totalorder %s14, 1
      %p116 = scmp.ne.s32.totalorder %s111, %s113
      %p117 = scmp.eq.s32.totalorder %s14, 0
      %p118 = por %p116, %p117
      %p119 = scmp.ne.s32.totalorder %s111, %s113
      %p120 = scmp.eq.s32.totalorder %s19, 1
      %p121 = por %p119, %p120
      %p122 = scmp.ne.s32.totalorder %s113, %s114
      %p123 = scmp.eq.s32.totalorder %s19, 0
      %p124 = por %p122, %p123
      %p125 = scmp.ne.s32.totalorder %s113, %s114
      %p126 = scmp.eq.s32.totalorder %s20, 1
      %p127 = por %p125, %p126
      %p129 = scmp.ne.s32.totalorder %s114, %s128
      %p130 = scmp.eq.s32.totalorder %s20, 0
      %p131 = por %p129, %p130
      %s132 = ssub.s32 %s14, %s21
      %p133 = scmp.eq.s32.totalorder %s132, 0
      %s135 = sadd.s32 %s134, 1
      %s136 = scalar_select %p133, %s134, %s135
      %p139 = pneg %p133
      %p140 = scmp.eq.s32.totalorder %s14, 1
      %p141 = por %p139, %p140
      %p142 = scmp.ne.s32.totalorder %s134, %s137
      %p143 = scmp.eq.s32.totalorder %s14, 0
      %p144 = por %p142, %p143
      %p145 = scmp.ne.s32.totalorder %s134, %s137
      %p146 = scmp.eq.s32.totalorder %s19, 1
      %p147 = por %p145, %p146
      %p148 = scmp.ne.s32.totalorder %s137, %s138
      %p149 = scmp.eq.s32.totalorder %s19, 0
      %p150 = por %p148, %p149
      %p151 = scmp.ne.s32.totalorder %s137, %s138
      %p152 = scmp.eq.s32.totalorder %s20, 1
      %p153 = por %p151, %p152
      %p155 = scmp.ne.s32.totalorder %s138, %s154
      %p156 = scmp.eq.s32.totalorder %s20, 0
      %p157 = por %p155, %p156
      %p158 = scmp.le.s32.totalorder 1, %s14
      %p159 = scmp.lt.s32.totalorder %s14, 3
      %p160 = pnand %p158, %p159
      %p161 = pneg %p160
      // Predicated region
      $region9: #{tpu_custom_call.1} parent=5 // pred_check
        _
      $region10: #{tpu_custom_call.1} parent=5 // pred_check_branch
        %163 = sbr.rel (%p160) target = $region12
      $region11: #{tpu_custom_call.1} parent=5 // pred_region
        %s164 = ssub.s32 %s14, 1
        // Predicated region
        $region13: #{tpu_custom_call.1} parent=11 // pred_check
          %p165 = pneg %p61
        $region14: #{tpu_custom_call.1} parent=11 // pred_check_branch
          %167 = sbr.rel (%p165) target = $region16
        $region15: #{tpu_custom_call.1} parent=11 // pred_region
          _
        $region16: #{tpu_custom_call.1} parent=11 // pred_fallthru
          _
        // Predicated region
        $region17: #{tpu_custom_call.1} parent=11 // pred_check
          %p168 = pneg %p82
        $region18: #{tpu_custom_call.1} parent=11 // pred_check_branch
          %170 = sbr.rel (%p168) target = $region20
        $region19: #{tpu_custom_call.1} parent=11 // pred_region
          _
        $region20: #{tpu_custom_call.1} parent=11 // pred_fallthru
          _
        // Predicated region
        $region21: #{tpu_custom_call.1} parent=11 // pred_check
          %p171 = pneg %p103
        $region22: #{tpu_custom_call.1} parent=11 // pred_check_branch
          %173 = sbr.rel (%p171) target = $region24
        $region23: #{tpu_custom_call.1} parent=11 // pred_region
          _
        $region24: #{tpu_custom_call.1} parent=11 // pred_fallthru
          _
        // Predicated region
        $region25: #{tpu_custom_call.1} parent=11 // pred_check
          %p174 = pneg %p124
        $region26: #{tpu_custom_call.1} parent=11 // pred_check_branch
          %176 = sbr.rel (%p174) target = $region28
        $region27: #{tpu_custom_call.1} parent=11 // pred_region
          _
        $region28: #{tpu_custom_call.1} parent=11 // pred_fallthru
          _
      $region12: #{tpu_custom_call.1} parent=5 // pred_fallthru
        _
      %p177 = scmp.lt.s32.totalorder %s14, 2
      // Predicated region
      $region29: #{tpu_custom_call.1} parent=5 // pred_check
        %p178 = pneg %p177
      $region30: #{tpu_custom_call.1} parent=5 // pred_check_branch
        %180 = sbr.rel (%p178) target = $region32
      $region31: #{tpu_custom_call.1} parent=5 // pred_region
        // Predicated region
        $region33: #{tpu_custom_call.1} parent=31 // pred_check
          %p181 = pneg %p34
        $region34: #{tpu_custom_call.1} parent=31 // pred_check_branch
          %183 = sbr.rel (%p181) target = $region36
        $region35: #{tpu_custom_call.1} parent=31 // pred_region
          %p184 = scmp.lt.s32.totalorder %s14, 1
          %s185 = scalar_select %p184, %s14, 1
          %s186 = smul.addr %s185, 8
          %s187 = scalar_lea.vmem %s0, %s186
        $region36: #{tpu_custom_call.1} parent=31 // pred_fallthru
          _
      $region32: #{tpu_custom_call.1} parent=5 // pred_fallthru
        _
      %p188 = scmp.le.s32.totalorder 1, %s14
      %p189 = scmp.lt.s32.totalorder %s14, 3
      %p190 = pnand %p188, %p189
      %p191 = pneg %p190
      // Predicated region
      $region37: #{tpu_custom_call.1} parent=5 // pred_check
        _
      $region38: #{tpu_custom_call.1} parent=5 // pred_check_branch
        %193 = sbr.rel (%p190) target = $region40
      $region39: #{tpu_custom_call.1} parent=5 // pred_region
        %s194 = ssub.s32 %s14, 1
        %p195 = scmp.lt.s32.totalorder %s19, 1
        %s196 = scalar_select %p195, %s19, 1
        %s197 = smul.addr %s196, 8
        %s198 = scalar_lea.vmem %s0, %s197
        %p199 = pneg %p40
        %p200 = pneg %p37
        %p201 = pneg %p61
        %p202 = pneg %p58
        %p203 = pneg %p82
        %p204 = pneg %p79
        %p205 = pneg %p103
        %p206 = pneg %p100
        %p207 = pneg %p124
        %p208 = pneg %p121
        %p209 = pneg %p150
        %p210 = pneg %p147
        %s211 = sand.u32 %s137, 1
        %s212 = scalar_lea.sflag [#allocation3], %s211
        %s213 = sand.u32 %s137, 1
        %s214 = smul.addr %s213, 8
        %s215 = scalar_lea.vmem [#allocation2], %s214
        %p216 = scmp.lt.s32.totalorder %s19, 1
        %s217 = scalar_select %p216, %s19, 1
        %s218 = smul.addr %s217, 8
        %s219 = scalar_lea.vmem %s0, %s218
        %v221 = vld [vmem:[%s219] sm:$0xff]
        %v222 = vpack.c.bf16 %v221, %v221
        %v223 = vld [vmem:[%s1] sm:$0xf]
        %v224 = vld [vmem:[%s1 + $0x4] sm:$0xf]
        %v225 = vld [vmem:[%s1 + $0x8] sm:$0xf]
        %v226 = vld [vmem:[%s1 + $0xc] sm:$0xf]
        %v227 = vld [vmem:[%s2] sm:$0x1]
        %v229 = vlaneseq
        %v230 = vshrl.u32 %v229, 7
        %v231 = vsub.s32 0, %v230
        %v232 = vrot.slane %v227, %v231
        %v238 = vunpack.c.l.b16 %v223
        %v239 = vunpack.c.l.b16 %v224
        %v240 = vunpack.c.l.b16 %v225
        %v241 = vunpack.c.l.b16 %v226
        %v242 = vpack.c.b16 %v239, %v238
        %v243 = vpack.c.b16 %v241, %v240
        %vm246 = vcmask 261120
        %v248 = vsel %vm246, %v222, 0
        %250 = vmatprep.subr.bf16.mxu0 0
        %251 = vmatpush1.bf16.msra.mxu0 %v242
        %252 = vmatprep.subr.bf16.mxu0 0
        %253 = vmatpush1.bf16.msra.mxu0 %v243
        %254 = vmatprep.subr.bf16.mxu0 0
        %255 = vmatpush1.bf16.msra.mxu0 0
        %256 = vmatprep.subr.bf16.mxu0 0
        %257 = vmatpush1.bf16.msra.mxu0 0
        %258 = vmatprep.subr.bf16.mxu0 0
        %259 = vmatpush1.bf16.msra.mxu0 0
        %260 = vmatprep.subr.bf16.mxu0 0
        %261 = vmatpush1.bf16.msra.mxu0 0
        %262 = vmatprep.subr.bf16.mxu0 0
        %263 = vmatpush1.bf16.msra.mxu0 0
        %264 = vmatprep.subr.bf16.mxu0 0
        %265 = vmatpush1.bf16.msra.mxu0 0
        %266 = vmatprep.subr.bf16.mxu0 0
        %267 = vmatpush1.bf16.msra.mxu0 0
        %268 = vmatprep.subr.bf16.mxu0 0
        %269 = vmatpush1.bf16.msra.mxu0 0
        %270 = vmatprep.subr.bf16.mxu0 0
        %271 = vmatpush1.bf16.msra.mxu0 0
        %272 = vmatprep.subr.bf16.mxu0 0
        %273 = vmatpush1.bf16.msra.mxu0 0
        %274 = vmatprep.subr.bf16.mxu0 0
        %275 = vmatpush1.bf16.msra.mxu0 0
        %276 = vmatprep.subr.bf16.mxu0 0
        %277 = vmatpush1.bf16.msra.mxu0 0
        %278 = vmatprep.subr.bf16.mxu0 0
        %279 = vmatpush1.bf16.msra.mxu0 0
        %280 = vmatprep.subr.bf16.mxu0 0
        %281 = vmatpush1.bf16.msra.mxu0 0
        %282 = vmatprep.mubr.bf16.mxu0 0
        %283 = vmatmul.mubr.bf16.gmra.mrb[0].mxu0 %v248
        %v284 = vpop.f32.mrb[0].mxu0
        %v285 = vadd.f32 %v232, %v284
        %v286 = vpop.f32.mrb[0].mxu0
        %v287 = vpop.f32.mrb[0].mxu0
        %v288 = vpop.f32.mrb[0].mxu0
        %289 = vdwg.mxu0
        %v290 = vmul.f32 %v285, %v285
        %v291 = vmul.f32 %v285, 0.5
        %v292 = vmul.f32 %v285, 0.044715
        %v293 = vmul.f32 %v292, %v290
        %v294 = vadd.f32 %v285, %v293
        %v295 = vmul.f32 %v294, 0.7978846
        %v296 = vtanh.pop %v295
        %v297 = vadd.f32 %v296, 1.0
        %v298 = vmul.f32 %v291, %v297
        %v299 = vpack.c.bf16 %v298, %v298
        %v300 = vld [vmem:[%s3] sm:$0xf]
        %v301 = vld [vmem:[%s3 + $0x4] sm:$0xf]
        %v302 = vld [vmem:[%s3 + $0x8] sm:$0xf]
        %v303 = vld [vmem:[%s3 + $0xc] sm:$0xf]
        %v304 = vld [vmem:[%s3 + $0x10] sm:$0xf]
        %v305 = vld [vmem:[%s3 + $0x14] sm:$0xf]
        %v306 = vld [vmem:[%s3 + $0x18] sm:$0xf]
        %v307 = vld [vmem:[%s3 + $0x1c] sm:$0xf]
        %v308 = vld [vmem:[%s4] sm:$0x1]
        %v310 = vlaneseq
        %v311 = vshrl.u32 %v310, 7
        %v312 = vsub.s32 0, %v311
        %v313 = vrot.slane %v308, %v312
        %v323 = vunpack.c.l.b16 %v300
        %v324 = vunpack.c.l.b16 %v301
        %v325 = vunpack.c.l.b16 %v302
        %v326 = vunpack.c.l.b16 %v303
        %v327 = vunpack.c.l.b16 %v304
        %v328 = vunpack.c.l.b16 %v305
        %v329 = vunpack.c.l.b16 %v306
        %v330 = vunpack.c.l.b16 %v307
        %v331 = vpack.c.b16 %v324, %v323
        %v332 = vpack.c.b16 %v326, %v325
        %v333 = vpack.c.b16 %v328, %v327
        %v334 = vpack.c.b16 %v330, %v329
        %vm339 = vcmask 523264
        %v341 = vsel %vm339, %v299, 0
        %343 = vmatprep.subr.bf16.mxu0 0
        %344 = vmatpush1.bf16.msra.mxu0 %v331
        %345 = vmatprep.subr.bf16.mxu0 0
        %346 = vmatpush1.bf16.msra.mxu0 %v332
        %347 = vmatprep.subr.bf16.mxu0 0
        %348 = vmatpush1.bf16.msra.mxu0 %v333
        %349 = vmatprep.subr.bf16.mxu0 0
        %350 = vmatpush1.bf16.msra.mxu0 %v334
        %351 = vmatprep.subr.bf16.mxu0 0
        %352 = vmatpush1.bf16.msra.mxu0 0
        %353 = vmatprep.subr.bf16.mxu0 0
        %354 = vmatpush1.bf16.msra.mxu0 0
        %355 = vmatprep.subr.bf16.mxu0 0
        %356 = vmatpush1.bf16.msra.mxu0 0
        %357 = vmatprep.subr.bf16.mxu0 0
        %358 = vmatpush1.bf16.msra.mxu0 0
        %359 = vmatprep.subr.bf16.mxu0 0
        %360 = vmatpush1.bf16.msra.mxu0 0
        %361 = vmatprep.subr.bf16.mxu0 0
        %362 = vmatpush1.bf16.msra.mxu0 0
        %363 = vmatprep.subr.bf16.mxu0 0
        %364 = vmatpush1.bf16.msra.mxu0 0
        %365 = vmatprep.subr.bf16.mxu0 0
        %366 = vmatpush1.bf16.msra.mxu0 0
        %367 = vmatprep.subr.bf16.mxu0 0
        %368 = vmatpush1.bf16.msra.mxu0 0
        %369 = vmatprep.subr.bf16.mxu0 0
        %370 = vmatpush1.bf16.msra.mxu0 0
        %371 = vmatprep.subr.bf16.mxu0 0
        %372 = vmatpush1.bf16.msra.mxu0 0
        %373 = vmatprep.subr.bf16.mxu0 0
        %374 = vmatpush1.bf16.msra.mxu0 0
        %375 = vmatprep.mubr.bf16.mxu0 0
        %376 = vmatmul.mubr.bf16.gmra.mrb[0].mxu0 %v341
        %v377 = vpop.f32.mrb[0].mxu0
        %v378 = vadd.f32 %v313, %v377
        %v379 = vpop.f32.mrb[0].mxu0
        %v380 = vpop.f32.mrb[0].mxu0
        %v381 = vpop.f32.mrb[0].mxu0
        %382 = vdwg.mxu0
        %383 = vst.msk [vmem:[%s215] sm:$0xff] %vm246, %v378
        %s384 = sand.u32 %s137, 1
        %s385 = scalar_lea.sflag [#allocation3], %s384
        %s386 = sand.u32 %s137, 1
        %s387 = smul.addr %s386, 8
        %s388 = scalar_lea.vmem [#allocation2], %s387
        // Predicated region
        $region41: #{tpu_custom_call.1} parent=39 // pred_check
          %p389 = pneg %p147
        $region42: #{tpu_custom_call.1} parent=39 // pred_check_branch
          %391 = sbr.rel (%p389) target = $region44
        $region43: #{tpu_custom_call.1} parent=39 // pred_region
          %s393 = ssub.s32 128, 128
          %394 = vsyncadd %s385, %s393
          %s395 = smul.addr %s19, 128
          %s396 = scalar_lea.hbm %s5, %s395
          %s398 = sshll.u32 %s388, 4
          %s399 = int_to_ptr.vmem [resolvable:$true] %s398
          %401 = dma.vmem_to_hbm [thread:$0]  %s399, 128, %s396, %s385
        $region44: #{tpu_custom_call.1} parent=39 // pred_fallthru
          _
      $region40: #{tpu_custom_call.1} parent=5 // pred_fallthru
        _
      %p402 = scmp.le.s32.totalorder 2, %s14
      // Predicated region
      $region45: #{tpu_custom_call.1} parent=5 // pred_check
        %p403 = pneg %p402
      $region46: #{tpu_custom_call.1} parent=5 // pred_check_branch
        %405 = sbr.rel (%p403) target = $region48
      $region47: #{tpu_custom_call.1} parent=5 // pred_region
        %s406 = ssub.s32 %s14, 2
        // Predicated region
        $region49: #{tpu_custom_call.1} parent=47 // pred_check
          %p407 = pneg %p153
        $region50: #{tpu_custom_call.1} parent=47 // pred_check_branch
          %409 = sbr.rel (%p407) target = $region52
        $region51: #{tpu_custom_call.1} parent=47 // pred_region
          %s410 = sand.u32 %s138, 1
          %s411 = scalar_lea.sflag [#allocation3], %s410
          %s412 = sand.u32 %s138, 1
          %s413 = smul.addr %s412, 8
          %s414 = scalar_lea.vmem [#allocation2], %s413
          %415 = dma.done %s411, 128
        $region52: #{tpu_custom_call.1} parent=47 // pred_fallthru
          _
      $region48: #{tpu_custom_call.1} parent=5 // pred_fallthru
        _
    $region6: #{tpu_custom_call.1} parent=1 // loop_footer
      %s18 = sadd.s32 1, %s14
    $region7: #{tpu_custom_call.1} parent=1 // loop_footer_branch
      %13 = sbr.rel target = $region3
    $region8: #{tpu_custom_call.1} parent=1 // loop_exit
      _
    %416 = vsyncpa [#allocation3], 1
    %s417 = scalar_lea.sflag [#allocation3], 1
    %418 = vsyncpa %s417, 1

</llo_original>
